<compile_context>
chip_gen: v5e
topology: v5e:2x2
jax: 0.10.0
libtpu: 0.0.40
codegen_flags: <defaults>
</compile_context>

<pallas_src>
import functools

import jax
import jax.numpy as jnp
from jax.experimental import pallas as pl
from jax.experimental.pallas import tpu as pltpu

IGNORE_INDEX = 255
LOSS_WEIGHT = 1.0


def _ce_kernel(logits_ref, target_ref, loss_ref, count_ref, *, s_total, tile_s):
    """One grid step: logits (1, C, TS) + targets (1, 1, TS) for one batch item."""
    s_idx = pl.program_id(1)

    @pl.when(s_idx == 0)
    def _():
        loss_ref[...] = jnp.zeros_like(loss_ref)
        count_ref[...] = jnp.zeros_like(count_ref)

    # Keep the HBM stream in the input dtype (bf16 stays bf16); upcast in-register.
    x = logits_ref[...].astype(jnp.float32)              # (1, C, TS)
    t = target_ref[...]                                   # (1, 1, TS) int32

    # Numerically stable log-sum-exp over the class (sublane) axis.
    m = jnp.max(x, axis=1, keepdims=True)                 # (1, 1, TS)
    lse = jnp.log(jnp.sum(jnp.exp(x - m), axis=1, keepdims=True)) + m

    # Gather the target-class logit with a select (no convert/multiply).
    class_ids = jax.lax.broadcasted_iota(jnp.int32, x.shape, 1)
    tgt_logit = jnp.sum(jnp.where(class_ids == t, x, 0.0), axis=1, keepdims=True)

    # Valid = not ignore_index AND inside the real spatial extent (ragged last tile).
    pos = jax.lax.broadcasted_iota(jnp.int32, t.shape, 2) + s_idx * tile_s
    valid = (t != IGNORE_INDEX) & (pos < s_total)

    nll = jnp.where(valid, lse - tgt_logit, 0.0)           # (1, 1, TS)

    loss_ref[...] += jnp.sum(nll)
    count_ref[...] += jnp.sum(valid.astype(jnp.int32))     # exact int32 count


@functools.partial(jax.jit, static_argnames=("tile_s",))
def cross_entropy_loss(pred, target, tile_s=512):
    """pred: (N, C, H, W) float logits (NCHW, like PyTorch); target: (N, H, W) int ids.

    Returns scalar mean cross-entropy over non-ignored positions, scaled by LOSS_WEIGHT.
    """
    N, C, H, W = pred.shape
    S = H * W

    # Free reshapes only -- no transpose, no padding pass over HBM.
    logits = pred.reshape(N, C, S)
    tgt = target.reshape(N, 1, S).astype(jnp.int32)

    # Spatial tile: large (fewer grid steps), lane-aligned (multiple of 128), and the
    # double-buffered logits tile stays well under the scoped VMEM limit on all chips
    # (incl. v7x's smaller VMEM).
    itemsize = jnp.dtype(pred.dtype).itemsize
    vmem_budget = 16 * 1024 * 1024
    max_ts = max(128, (vmem_budget // (2 * C * itemsize)) // 128 * 128)
    ts = min(tile_s, max_ts)
    if S <= ts:
        ts = S                      # single full-extent tile (any size allowed)
    grid = (N, pl.cdiv(S, ts))

    kernel = functools.partial(_ce_kernel, s_total=S, tile_s=ts)

    loss_sum, count = pl.pallas_call(
        kernel,
        out_shape=(jax.ShapeDtypeStruct((N, 1, 1), jnp.float32),
                   jax.ShapeDtypeStruct((N, 1, 1), jnp.int32)),
        grid_spec=pltpu.PrefetchScalarGridSpec(
            num_scalar_prefetch=0,
            grid=grid,
            in_specs=[
                pl.BlockSpec((1, C, ts), lambda n, s: (n, 0, s)),
                pl.BlockSpec((1, 1, ts), lambda n, s: (n, 0, s)),
            ],
            out_specs=[
                pl.BlockSpec((1, 1, 1), lambda n, s: (n, 0, 0)),
                pl.BlockSpec((1, 1, 1), lambda n, s: (n, 0, 0)),
            ],
        ),
        compiler_params=pltpu.CompilerParams(
            # Batch axis is embarrassingly parallel (v7x megacore); the spatial axis
            # carries the per-batch accumulator so it stays "arbitrary".
            dimension_semantics=("parallel", "arbitrary")),
    )(logits, tgt)

    total = jnp.sum(loss_sum)
    n_valid = jnp.sum(count).astype(jnp.float32)
    # reduction='mean' over non-ignored elements (nan if all ignored, matching PyTorch).
    return (total / n_valid) * LOSS_WEIGHT


def _reference(pred, target):
    """Pure-JAX reference of nn.CrossEntropyLoss(ignore_index=255, reduction='mean')."""
    N, C, H, W = pred.shape
    logits = jnp.transpose(pred, (0, 2, 3, 1)).reshape(-1, C).astype(jnp.float32)
    tgt = target.reshape(-1).astype(jnp.int32)
    valid = tgt != IGNORE_INDEX
    logp = jax.nn.log_softmax(logits, axis=-1)
    safe_tgt = jnp.where(valid, tgt, 0)
    nll = -jnp.take_along_axis(logp, safe_tgt[:, None], axis=-1)[:, 0]
    nll = jnp.where(valid, nll, 0.0)
    return (jnp.sum(nll) / jnp.sum(valid.astype(jnp.float32))) * LOSS_WEIGHT


if __name__ == "__main__":
    key = jax.random.PRNGKey(0)
    k1, k2, k3 = jax.random.split(key, 3)

    N, C, H, W = 2, 4, 16, 16
    pred = jax.random.normal(k1, (N, C, H, W), dtype=jnp.float32)
    target = jax.random.randint(k2, (N, H, W), 0, C).astype(jnp.int32)
    # sprinkle some ignored pixels
    ignore_mask = jax.random.bernoulli(k3, 0.1, (N, H, W))
    target = jnp.where(ignore_mask, IGNORE_INDEX, target)

    out = cross_entropy_loss(pred, target)
    out = jax.block_until_ready(out)

    ref = _reference(pred, target)
    assert jnp.allclose(out, ref, atol=1e-5, rtol=1e-5), (out, ref)

    print("KERNEL_OK")
</pallas_src>

<mosaic_0001>
module attributes {stable_mosaic.version = 11 : i64} {
  func.func @_ce_kernel(%arg0: i32, %arg1: i32, %arg2: memref<1x4x256xf32, #tpu.memory_space<vmem>>, %arg3: memref<1x1x256xi32, #tpu.memory_space<vmem>>, %arg4: memref<1x1x1xf32, #tpu.memory_space<vmem>>, %arg5: memref<1x1x1xi32, #tpu.memory_space<vmem>>) attributes {dimension_semantics = [#tpu.dimension_semantics<parallel>, #tpu.dimension_semantics<arbitrary>], iteration_bounds = array<i64: 2, 1>, scalar_prefetch = 0 : i64, scratch_operands = 0 : i64, tpu.core_type = #tpu.core_type<tc>, window_params = [{transform_indices = @transform_0, window_bounds = array<i64: 1, 4, 256>}, {transform_indices = @transform_1, window_bounds = array<i64: 1, 1, 256>}, {transform_indices = @transform_2, window_bounds = array<i64: 1, 1, 1>}, {transform_indices = @transform_3, window_bounds = array<i64: 1, 1, 1>}]} {
    %c0_i32 = arith.constant 0 : i32
    %0 = arith.cmpi eq, %arg1, %c0_i32 : i32
    %1 = arith.extui %0 : i1 to i32
    %c0_i32_0 = arith.constant 0 : i32
    %2 = arith.cmpi ne, %1, %c0_i32_0 : i32
    scf.if %2 {
      %cst_25 = arith.constant 0.000000e+00 : f32
      %50 = vector.broadcast %cst_25 : f32 to vector<1x1x1xf32>
      %c0_26 = arith.constant 0 : index
      %c0_27 = arith.constant 0 : index
      %c0_28 = arith.constant 0 : index
      %51 = vector.load %arg4[%c0_26, %c0_27, %c0_28] : memref<1x1x1xf32, #tpu.memory_space<vmem>>, vector<1x1x1xf32>
      tpu.vector_store %arg4[%c0_26, %c0_27, %c0_28], %50 {strides = array<i32>} : memref<1x1x1xf32, #tpu.memory_space<vmem>>, vector<1x1x1xf32>,
      %c0_i32_29 = arith.constant 0 : i32
      %52 = vector.broadcast %c0_i32_29 : i32 to vector<1x1x1xi32>
      %c0_30 = arith.constant 0 : index
      %c0_31 = arith.constant 0 : index
      %c0_32 = arith.constant 0 : index
      %53 = vector.load %arg5[%c0_30, %c0_31, %c0_32] : memref<1x1x1xi32, #tpu.memory_space<vmem>>, vector<1x1x1xi32>
      tpu.vector_store %arg5[%c0_30, %c0_31, %c0_32], %52 {strides = array<i32>} : memref<1x1x1xi32, #tpu.memory_space<vmem>>, vector<1x1x1xi32>,
    } else {
    }
    %c0 = arith.constant 0 : index
    %c0_1 = arith.constant 0 : index
    %c0_2 = arith.constant 0 : index
    %3 = vector.load %arg2[%c0, %c0_1, %c0_2] : memref<1x4x256xf32, #tpu.memory_space<vmem>>, vector<1x4x256xf32>
    %c0_3 = arith.constant 0 : index
    %c0_4 = arith.constant 0 : index
    %c0_5 = arith.constant 0 : index
    %4 = vector.load %arg3[%c0_3, %c0_4, %c0_5] : memref<1x1x256xi32, #tpu.memory_space<vmem>>, vector<1x1x256xi32>
    %cst = arith.constant dense<0xFF800000> : vector<1x256xf32>
    %5 = vector.multi_reduction <maximumf>, %3, %cst [1] : vector<1x4x256xf32> to vector<1x256xf32>
    %6 = vector.shape_cast %5 : vector<1x256xf32> to vector<1x1x256xf32>
    %7 = vector.broadcast %6 : vector<1x1x256xf32> to vector<1x4x256xf32>
    %8 = arith.subf %3, %7 : vector<1x4x256xf32>
    %9 = math.exp %8 : vector<1x4x256xf32>
    %cst_6 = arith.constant dense<0.000000e+00> : vector<1x256xf32>
    %10 = vector.multi_reduction <add>, %9, %cst_6 [1] : vector<1x4x256xf32> to vector<1x256xf32>
    %11 = vector.shape_cast %10 : vector<1x256xf32> to vector<1x1x256xf32>
    %12 = math.log %11 : vector<1x1x256xf32>
    %13 = arith.addf %12, %6 : vector<1x1x256xf32>
    %14 = tpu.iota {dimensions = array<i32: 1>} : vector<1x4x256xi32>
    %15 = vector.broadcast %4 : vector<1x1x256xi32> to vector<1x4x256xi32>
    %16 = arith.cmpi eq, %14, %15 : vector<1x4x256xi32>
    %cst_7 = arith.constant 0.000000e+00 : f32
    %17 = vector.broadcast %cst_7 : f32 to vector<1x4x256xf32>
    %18 = arith.select %16, %3, %17 : vector<1x4x256xi1>, vector<1x4x256xf32>
    %cst_8 = arith.constant dense<0.000000e+00> : vector<1x256xf32>
    %19 = vector.multi_reduction <add>, %18, %cst_8 [1] : vector<1x4x256xf32> to vector<1x256xf32>
    %20 = vector.shape_cast %19 : vector<1x256xf32> to vector<1x1x256xf32>
    %21 = tpu.iota {dimensions = array<i32: 2>} : vector<1x1x256xi32>
    %c256_i32 = arith.constant 256 : i32
    %22 = arith.muli %arg1, %c256_i32 : i32
    %23 = vector.broadcast %22 : i32 to vector<1x1x256xi32>
    %24 = arith.addi %21, %23 : vector<1x1x256xi32>
    %c255_i32 = arith.constant 255 : i32
    %25 = vector.broadcast %c255_i32 : i32 to vector<1x1x256xi32>
    %26 = arith.cmpi ne, %4, %25 : vector<1x1x256xi32>
    %c256_i32_9 = arith.constant 256 : i32
    %27 = vector.broadcast %c256_i32_9 : i32 to vector<1x1x256xi32>
    %28 = arith.cmpi slt, %24, %27 : vector<1x1x256xi32>
    %29 = arith.andi %26, %28 : vector<1x1x256xi1>
    %30 = arith.subf %13, %20 : vector<1x1x256xf32>
    %cst_10 = arith.constant 0.000000e+00 : f32
    %31 = vector.broadcast %cst_10 : f32 to vector<1x1x256xf32>
    %32 = arith.select %29, %30, %31 : vector<1x1x256xi1>, vector<1x1x256xf32>
    %c0_11 = arith.constant 0 : index
    %c0_12 = arith.constant 0 : index
    %c0_13 = arith.constant 0 : index
    %33 = vector.load %arg4[%c0_11, %c0_12, %c0_13] : memref<1x1x1xf32, #tpu.memory_space<vmem>>, vector<1x1x1xf32>
    %34 = vector.shape_cast %32 : vector<1x1x256xf32> to vector<1x1x1x256xf32>
    %cst_14 = arith.constant dense<0.000000e+00> : vector<1xf32>
    %35 = vector.multi_reduction <add>, %34, %cst_14 [1, 2, 3] : vector<1x1x1x256xf32> to vector<1xf32>
    %36 = vector.shape_cast %35 : vector<1xf32> to vector<1x1x1x1xf32>
    %37 = vector.extract %36[0, 0, 0, 0] : f32 from vector<1x1x1x1xf32>
    %38 = vector.broadcast %37 : f32 to vector<1x1x1xf32>
    %39 = arith.addf %33, %38 : vector<1x1x1xf32>
    %c0_15 = arith.constant 0 : index
    %c0_16 = arith.constant 0 : index
    %c0_17 = arith.constant 0 : index
    %40 = vector.load %arg4[%c0_15, %c0_16, %c0_17] : memref<1x1x1xf32, #tpu.memory_space<vmem>>, vector<1x1x1xf32>
    tpu.vector_store %arg4[%c0_15, %c0_16, %c0_17], %39 {strides = array<i32>} : memref<1x1x1xf32, #tpu.memory_space<vmem>>, vector<1x1x1xf32>,
    %c0_18 = arith.constant 0 : index
    %c0_19 = arith.constant 0 : index
    %c0_20 = arith.constant 0 : index
    %41 = vector.load %arg5[%c0_18, %c0_19, %c0_20] : memref<1x1x1xi32, #tpu.memory_space<vmem>>, vector<1x1x1xi32>
    %42 = arith.extui %29 : vector<1x1x256xi1> to vector<1x1x256xi32>
    %43 = vector.shape_cast %42 : vector<1x1x256xi32> to vector<1x1x1x256xi32>
    %cst_21 = arith.constant dense<0> : vector<1xi32>
    %44 = vector.multi_reduction <add>, %43, %cst_21 [1, 2, 3] : vector<1x1x1x256xi32> to vector<1xi32>
    %45 = vector.shape_cast %44 : vector<1xi32> to vector<1x1x1x1xi32>
    %46 = vector.extract %45[0, 0, 0, 0] : i32 from vector<1x1x1x1xi32>
    %47 = vector.broadcast %46 : i32 to vector<1x1x1xi32>
    %48 = arith.addi %41, %47 : vector<1x1x1xi32>
    %c0_22 = arith.constant 0 : index
    %c0_23 = arith.constant 0 : index
    %c0_24 = arith.constant 0 : index
    %49 = vector.load %arg5[%c0_22, %c0_23, %c0_24] : memref<1x1x1xi32, #tpu.memory_space<vmem>>, vector<1x1x1xi32>
    tpu.vector_store %arg5[%c0_22, %c0_23, %c0_24], %48 {strides = array<i32>} : memref<1x1x1xi32, #tpu.memory_space<vmem>>, vector<1x1x1xi32>,
    return
  }
  func.func @transform_0(%arg0: i32, %arg1: i32) -> (i32, i32, i32) {
    %c0_i32 = arith.constant 0 : i32
    %c0_i32_0 = arith.constant 0 : i32
    return %arg0, %c0_i32, %arg1 : i32, i32, i32
  }
  func.func @transform_1(%arg0: i32, %arg1: i32) -> (i32, i32, i32) {
    %c0_i32 = arith.constant 0 : i32
    %c0_i32_0 = arith.constant 0 : i32
    return %arg0, %c0_i32, %arg1 : i32, i32, i32
  }
  func.func @transform_2(%arg0: i32, %arg1: i32) -> (i32, i32, i32) {
    %c0_i32 = arith.constant 0 : i32
    %c0_i32_0 = arith.constant 0 : i32
    %c0_i32_1 = arith.constant 0 : i32
    return %arg0, %c0_i32, %c0_i32_0 : i32, i32, i32
  }
  func.func @transform_3(%arg0: i32, %arg1: i32) -> (i32, i32, i32) {
    %c0_i32 = arith.constant 0 : i32
    %c0_i32_0 = arith.constant 0 : i32
    %c0_i32_1 = arith.constant 0 : i32
    return %arg0, %c0_i32, %c0_i32_0 : i32, i32, i32
  }
}

</mosaic_0001>

<llo_original>
// kernel: cross_entropy_loss.1
$region0: #{cross_entropy_loss.1}
  #allocation0 [shape = 'u32[]', space=smem, size = 0x4, offset = 0x4, fixed_abs, tag = 'smem constant byte address 0x4 - core index']
  #allocation1 [shape = 'u32[72,128]{1,0:T(1,128)}', space=vmem, size = 0x9000, scoped, tag = 'internal scratch']
  %s0 = inlined_call_operand.vmem [shape: f32[2,4,256], index: 0, kind: input, shape index: {}]
  %s1 = inlined_call_operand.vmem [shape: s32[2,1,256], index: 1, kind: input, shape index: {}]
  %s2 = inlined_call_operand.vmem [shape: f32[2,1,1], index: 2, kind: output, shape index: {0}]
  %s3 = inlined_call_operand.vmem [shape: s32[2,1,1], index: 3, kind: output, shape index: {1}]
  %4 = xla_tuple %s2, %s3
  %s5 = sld [smem:[#allocation0]]
  $region53: #{cross_entropy_loss.1} parent=0
    _
  %s7 = ssub.s32 1, %s5
  %s8 = scalar_select 0, %s7, %s5
  loop: start=0, step=1, limit=4
  $region2: #{cross_entropy_loss.1} parent=0 // loop_pre_header
    _
  $region3: #{cross_entropy_loss.1} parent=0 // loop_header
    %s10 = sphi 0, %s14
    %p11 = scmp.ge.s32.totalorder %s10, 4
    %s17 = sphi 0, %s29
    %s18 = sphi 0, %s25
    %s19 = sphi 0, %s17
    %s20 = sphi 0, %s18
    %s21 = sphi 0, %s19
    %s22 = sphi 0, %s20
    %s34 = sphi 0, %s36
    %s37 = sphi 0, %s34
    %s38 = sphi 0, %s37
    %s54 = sphi 0, %s38
    %s62 = sphi 0, %s64
    %s65 = sphi 0, %s62
    %s66 = sphi 0, %s65
    %s82 = sphi 0, %s66
    %s88 = sphi 0, %s90
    %s91 = sphi 0, %s88
    %s92 = sphi 0, %s91
    %s108 = sphi 0, %s92
    %s114 = sphi 0, %s116
    %s117 = sphi 0, %s114
    %s118 = sphi 0, %s117
    %s134 = sphi 0, %s118
  $region4: #{cross_entropy_loss.1} parent=0 // loop_header_branch
    %13 = sbr.rel (%p11) target = $region8
  $region5: #{cross_entropy_loss.1} parent=0 // loop_body
    %s15 = ssub.s32 %s10, 1
    %s16 = ssub.s32 %s10, 2
    %s23 = sadd.s32 1, %s18
    %p24 = scmp.ge.s32.totalorder %s23, 1
    %s25 = scalar_select %p24, 0, %s23
    %s26 = sadd.s32 1, %s17
    %s27 = scalar_select %p24, %s26, %s17
    %p28 = scmp.ge.s32.totalorder %s27, 2
    %s29 = scalar_select %p28, 0, %s27
    %s30 = ssub.s32 %s17, %s29
    %s31 = ssub.s32 %s18, %s25
    %s32 = sor.u32 %s30, %s31
    %p33 = scmp.eq.s32.totalorder %s32, 0
    %s35 = sadd.s32 %s34, 1
    %s36 = scalar_select %p33, %s34, %s35
    %p39 = pneg %p33
    %p40 = scmp.eq.s32.totalorder %s10, 1
    %p41 = por %p39, %p40
    %p42 = scmp.ne.s32.totalorder %s34, %s37
    %p43 = scmp.eq.s32.totalorder %s10, 0
    %p44 = por %p42, %p43
    %p45 = scmp.ne.s32.totalorder %s34, %s37
    %p46 = scmp.eq.s32.totalorder %s15, 1
    %p47 = por %p45, %p46
    %p48 = scmp.ne.s32.totalorder %s37, %s38
    %p49 = scmp.eq.s32.totalorder %s15, 0
    %p50 = por %p48, %p49
    %p51 = scmp.ne.s32.totalorder %s37, %s38
    %p52 = scmp.eq.s32.totalorder %s16, 1
    %p53 = por %p51, %p52
    %p55 = scmp.ne.s32.totalorder %s38, %s54
    %p56 = scmp.eq.s32.totalorder %s16, 0
    %p57 = por %p55, %p56
    %s58 = ssub.s32 %s17, %s29
    %s59 = ssub.s32 %s18, %s25
    %s60 = sor.u32 %s58, %s59
    %p61 = scmp.eq.s32.totalorder %s60, 0
    %s63 = sadd.s32 %s62, 1
    %s64 = scalar_select %p61, %s62, %s63
    %p67 = pneg %p61
    %p68 = scmp.eq.s32.totalorder %s10, 1
    %p69 = por %p67, %p68
    %p70 = scmp.ne.s32.totalorder %s62, %s65
    %p71 = scmp.eq.s32.totalorder %s10, 0
    %p72 = por %p70, %p71
    %p73 = scmp.ne.s32.totalorder %s62, %s65
    %p74 = scmp.eq.s32.totalorder %s15, 1
    %p75 = por %p73, %p74
    %p76 = scmp.ne.s32.totalorder %s65, %s66
    %p77 = scmp.eq.s32.totalorder %s15, 0
    %p78 = por %p76, %p77
    %p79 = scmp.ne.s32.totalorder %s65, %s66
    %p80 = scmp.eq.s32.totalorder %s16, 1
    %p81 = por %p79, %p80
    %p83 = scmp.ne.s32.totalorder %s66, %s82
    %p84 = scmp.eq.s32.totalorder %s16, 0
    %p85 = por %p83, %p84
    %s86 = ssub.s32 %s17, %s29
    %p87 = scmp.eq.s32.totalorder %s86, 0
    %s89 = sadd.s32 %s88, 1
    %s90 = scalar_select %p87, %s88, %s89
    %p93 = pneg %p87
    %p94 = scmp.eq.s32.totalorder %s10, 1
    %p95 = por %p93, %p94
    %p96 = scmp.ne.s32.totalorder %s88, %s91
    %p97 = scmp.eq.s32.totalorder %s10, 0
    %p98 = por %p96, %p97
    %p99 = scmp.ne.s32.totalorder %s88, %s91
    %p100 = scmp.eq.s32.totalorder %s15, 1
    %p101 = por %p99, %p100
    %p102 = scmp.ne.s32.totalorder %s91, %s92
    %p103 = scmp.eq.s32.totalorder %s15, 0
    %p104 = por %p102, %p103
    %p105 = scmp.ne.s32.totalorder %s91, %s92
    %p106 = scmp.eq.s32.totalorder %s16, 1
    %p107 = por %p105, %p106
    %p109 = scmp.ne.s32.totalorder %s92, %s108
    %p110 = scmp.eq.s32.totalorder %s16, 0
    %p111 = por %p109, %p110
    %s112 = ssub.s32 %s17, %s29
    %p113 = scmp.eq.s32.totalorder %s112, 0
    %s115 = sadd.s32 %s114, 1
    %s116 = scalar_select %p113, %s114, %s115
    %p119 = pneg %p113
    %p120 = scmp.eq.s32.totalorder %s10, 1
    %p121 = por %p119, %p120
    %p122 = scmp.ne.s32.totalorder %s114, %s117
    %p123 = scmp.eq.s32.totalorder %s10, 0
    %p124 = por %p122, %p123
    %p125 = scmp.ne.s32.totalorder %s114, %s117
    %p126 = scmp.eq.s32.totalorder %s15, 1
    %p127 = por %p125, %p126
    %p128 = scmp.ne.s32.totalorder %s117, %s118
    %p129 = scmp.eq.s32.totalorder %s15, 0
    %p130 = por %p128, %p129
    %p131 = scmp.ne.s32.totalorder %s117, %s118
    %p132 = scmp.eq.s32.totalorder %s16, 1
    %p133 = por %p131, %p132
    %p135 = scmp.ne.s32.totalorder %s118, %s134
    %p136 = scmp.eq.s32.totalorder %s16, 0
    %p137 = por %p135, %p136
    %p138 = scmp.le.s32.totalorder 1, %s10
    %p139 = scmp.lt.s32.totalorder %s10, 3
    %p140 = pnand %p138, %p139
    %p141 = pneg %p140
    // Predicated region
    $region9: #{cross_entropy_loss.1} parent=5 // pred_check
      _
    $region10: #{cross_entropy_loss.1} parent=5 // pred_check_branch
      %143 = sbr.rel (%p140) target = $region12
    $region11: #{cross_entropy_loss.1} parent=5 // pred_region
      %s144 = ssub.s32 %s10, 1
    $region12: #{cross_entropy_loss.1} parent=5 // pred_fallthru
      _
    %p145 = scmp.lt.s32.totalorder %s10, 2
    // Predicated region
    $region13: #{cross_entropy_loss.1} parent=5 // pred_check
      %p146 = pneg %p145
    $region14: #{cross_entropy_loss.1} parent=5 // pred_check_branch
      %148 = sbr.rel (%p146) target = $region16
    $region15: #{cross_entropy_loss.1} parent=5 // pred_region
      // Predicated region
      $region17: #{cross_entropy_loss.1} parent=15 // pred_check
        %p149 = pneg %p44
      $region18: #{cross_entropy_loss.1} parent=15 // pred_check_branch
        %151 = sbr.rel (%p149) target = $region20
      $region19: #{cross_entropy_loss.1} parent=15 // pred_region
        %s152 = smul.u32 2, %s18
        %p153 = scmp.lt.s32.totalorder %s17, 1
        %s154 = scalar_select %p153, %s17, 1
        %p155 = scmp.lt.s32.totalorder %s152, 1
        %s156 = scalar_select %p155, %s152, 1
        %s157 = smul.addr %s154, 2
        %s158 = sadd.s32 %s156, %s157
        %s159 = smul.addr %s158, 4
        %s160 = scalar_lea.vmem %s0, %s159
        %s161 = smul.u32 2, %s18
      $region20: #{cross_entropy_loss.1} parent=15 // pred_fallthru
        _
      // Predicated region
      $region21: #{cross_entropy_loss.1} parent=15 // pred_check
        %p162 = pneg %p72
      $region22: #{cross_entropy_loss.1} parent=15 // pred_check_branch
        %164 = sbr.rel (%p162) target = $region24
      $region23: #{cross_entropy_loss.1} parent=15 // pred_region
        %s165 = smul.u32 2, %s18
        %p166 = scmp.lt.s32.totalorder %s17, 1
        %s167 = scalar_select %p166, %s17, 1
        %p168 = scmp.lt.s32.totalorder %s165, 1
        %s169 = scalar_select %p168, %s165, 1
        %s170 = smul.addr %s167, 2
        %s171 = sadd.s32 %s169, %s170
        %s172 = scalar_lea.vmem %s1, %s171
        %s173 = smul.u32 2, %s18
      $region24: #{cross_entropy_loss.1} parent=15 // pred_fallthru
        _
    $region16: #{cross_entropy_loss.1} parent=5 // pred_fallthru
      _
    %p174 = scmp.le.s32.totalorder 1, %s10
    %p175 = scmp.lt.s32.totalorder %s10, 3
    %p176 = pnand %p174, %p175
    %p177 = pneg %p176
    // Predicated region
    $region25: #{cross_entropy_loss.1} parent=5 // pred_check
      _
    $region26: #{cross_entropy_loss.1} parent=5 // pred_check_branch
      %179 = sbr.rel (%p176) target = $region28
    $region27: #{cross_entropy_loss.1} parent=5 // pred_region
      %s180 = ssub.s32 %s10, 1
      %s181 = smul.u32 2, %s20
      %p182 = scmp.lt.s32.totalorder %s19, 1
      %s183 = scalar_select %p182, %s19, 1
      %p184 = scmp.lt.s32.totalorder %s181, 1
      %s185 = scalar_select %p184, %s181, 1
      %s186 = smul.addr %s183, 2
      %s187 = sadd.s32 %s185, %s186
      %s188 = smul.addr %s187, 4
      %s189 = scalar_lea.vmem %s0, %s188
      %p190 = pneg %p50
      %p191 = pneg %p47
      %s192 = smul.u32 2, %s20
      %p193 = scmp.lt.s32.totalorder %s19, 1
      %s194 = scalar_select %p193, %s19, 1
      %p195 = scmp.lt.s32.totalorder %s192, 1
      %s196 = scalar_select %p195, %s192, 1
      %s197 = smul.addr %s194, 2
      %s198 = sadd.s32 %s196, %s197
      %s199 = scalar_lea.vmem %s1, %s198
      %p200 = pneg %p78
      %p201 = pneg %p75
      %p202 = pneg %p104
      %p203 = pneg %p101
      %p204 = scmp.lt.s32.totalorder %s19, 1
      %s205 = scalar_select %p204, %s19, 1
      %s206 = scalar_lea.vmem %s2, %s205
      %p207 = pneg %p130
      %p208 = pneg %p127
      %p209 = scmp.lt.s32.totalorder %s19, 1
      %s210 = scalar_select %p209, %s19, 1
      %s211 = scalar_lea.vmem %s3, %s210
      %s212 = smul.u32 2, %s20
      %p213 = scmp.lt.s32.totalorder %s19, 1
      %s214 = scalar_select %p213, %s19, 1
      %p215 = scmp.lt.s32.totalorder %s212, 1
      %s216 = scalar_select %p215, %s212, 1
      %s217 = smul.addr %s214, 2
      %s218 = sadd.s32 %s216, %s217
      %s219 = smul.addr %s218, 4
      %s220 = scalar_lea.vmem %s0, %s219
      %s221 = smul.u32 2, %s20
      %s222 = smul.u32 2, %s20
      %p223 = scmp.lt.s32.totalorder %s19, 1
      %s224 = scalar_select %p223, %s19, 1
      %p225 = scmp.lt.s32.totalorder %s222, 1
      %s226 = scalar_select %p225, %s222, 1
      %s227 = smul.addr %s224, 2
      %s228 = sadd.s32 %s226, %s227
      %s229 = scalar_lea.vmem %s1, %s228
      %s230 = smul.u32 2, %s20
      %p231 = scmp.lt.s32.totalorder %s19, 1
      %s232 = scalar_select %p231, %s19, 1
      %s233 = scalar_lea.vmem %s2, %s232
      %p234 = scmp.lt.s32.totalorder %s19, 1
      %s235 = scalar_select %p234, %s19, 1
      %s236 = scalar_lea.vmem %s3, %s235
      %p237 = scmp.eq.s32.totalorder %s20, 0
      // Predicated region
      $region29: #{cross_entropy_loss.1} parent=27 // pred_check
        %p238 = pneg %p237
      $region30: #{cross_entropy_loss.1} parent=27 // pred_check_branch
        %240 = sbr.rel (%p238) target = $region32
      $region31: #{cross_entropy_loss.1} parent=27 // pred_region
        %vm241 = vcmask 0
        %242 = vst.msk [vmem:[%s233] sm:$0x1] %vm241, 0.0
        %243 = vst.msk [vmem:[%s236] sm:$0x1] %vm241, 0
      $region32: #{cross_entropy_loss.1} parent=27 // pred_fallthru
        _
      %v244 = vld [vmem:[%s220] sm:$0xff]
      %v245 = vld [vmem:[%s229] sm:$0x3]
      %247 = vst [vmem:[#allocation1] ss:$2 sm:$0xff] %v244
      %v248 = vld.sshfl [vmem:[#allocation1] sm:$0xff pattern:$0x75316420]
      %v249 = vld.sshfl [vmem:[#allocation1 + $0x8] sm:$0xff pattern:$0x75316420]
      %vm252 = vcmask 1043456
      %v253 = vsel %vm252, %v248, -inf
      %v254 = vrot.slane %v253, 4
      %v255 = vmax.f32 %v253, %v254
      %v256 = vrot.slane %v255, 2
      %v257 = vmax.f32 %v255, %v256
      %v258 = vrot.slane %v257, 1
      %v259 = vmax.f32 %v257, %v258
      %v260 = vsel %vm252, %v249, -inf
      %v261 = vrot.slane %v260, 4
      %v262 = vmax.f32 %v260, %v261
      %v263 = vrot.slane %v262, 2
      %v264 = vmax.f32 %v262, %v263
      %v265 = vrot.slane %v264, 1
      %v266 = vmax.f32 %v264, %v265
      %v269 = vrot.slane %v266, 4
      %v270 = vsel %vm252, %v259, %v269
      %v272 = vsub.f32 %v244, %v270
      %v273 = vmul.f32 %v272, 1.442695
      %v274 = vpow.pop %v273
      %276 = vst [vmem:[#allocation1] ss:$2 sm:$0xff] %v274
      %v277 = vld.sshfl [vmem:[#allocation1] sm:$0xff pattern:$0x75316420]
      %v278 = vld.sshfl [vmem:[#allocation1 + $0x8] sm:$0xff pattern:$0x75316420]
      %v281 = vsel %vm252, %v277, 0.0
      %v282 = vrot.slane %v281, 4
      %v283 = vadd.f32 %v281, %v282
      %v284 = vrot.slane %v283, 2
      %v285 = vadd.f32 %v283, %v284
      %v286 = vrot.slane %v285, 1
      %v287 = vadd.f32 %v285, %v286
      %v288 = vsel %vm252, %v278, 0.0
      %v289 = vrot.slane %v288, 4
      %v290 = vadd.f32 %v288, %v289
      %v291 = vrot.slane %v290, 2
      %v292 = vadd.f32 %v290, %v291
      %v293 = vrot.slane %v292, 1
      %v294 = vadd.f32 %v292, %v293
      %v295 = vlog2.pop %v287
      %v296 = vmul.f32 %v295, 0.6931472
      %v297 = vlog2.pop %v294
      %v298 = vmul.f32 %v297, 0.6931472
      %v299 = vadd.f32 %v296, %v259
      %v300 = vadd.f32 %v298, %v266
      %v301 = vlaneseq
      %v302 = vshrl.u32 %v301, 7
      %v303 = vperm.slane %v245, 0
      %v304 = vperm.slane %v245, 1
      %vm305 = vcmp.eq.s32.totalorder %v302, %v303
      %vm306 = vcmp.eq.s32.totalorder %v302, %v304
      %307 = vst [vmem:[#allocation1] ss:$2 sm:$0xff] %v244
      %v308 = vld.sshfl [vmem:[#allocation1] sm:$0xff pattern:$0x75316420]
      %v309 = vld.sshfl [vmem:[#allocation1 + $0x8] sm:$0xff pattern:$0x75316420]
      %v312 = vsel %vm305, %v308, 0.0
      %v313 = vsel %vm306, %v309, 0.0
      %v314 = vsel %vm252, %v312, 0.0
      %v315 = vrot.slane %v314, 4
      %v316 = vadd.f32 %v314, %v315
      %v317 = vrot.slane %v316, 2
      %v318 = vadd.f32 %v316, %v317
      %v319 = vrot.slane %v318, 1
      %v320 = vadd.f32 %v318, %v319
      %v321 = vsel %vm252, %v313, 0.0
      %v322 = vrot.slane %v321, 4
      %v323 = vadd.f32 %v321, %v322
      %v324 = vrot.slane %v323, 2
      %v325 = vadd.f32 %v323, %v324
      %v326 = vrot.slane %v325, 1
      %v327 = vadd.f32 %v325, %v326
      %v328 = vlaneseq
      %v329 = vand.u32 %v328, 127
      %v330 = vadd.s32 %v329, 128
      %s331 = smul.u32 %s20, 256
      %v332 = vstv %s331
      %v333 = vadd.s32 %v329, %v332
      %v334 = vadd.s32 %v330, %v332
      %vm335 = vcmp.ne.s32.totalorder %v245, 255
      %vm336 = vcmp.lt.s32.totalorder %v333, 256
      %vm337 = vcmp.lt.s32.totalorder %v334, 256
      %v338 = vsel %vm336, 1, 0
      %v339 = vsel %vm337, 1, 0
      %v340 = vrot.slane %v339, 7
      %vm341 = vcmask 1040384
      %v342 = vsel %vm341, %v338, %v340
      %vm343 = vcmp.ne.s32.totalorder %v342, 0
      %vm344 = vmand %vm335, %vm343
      %v345 = vsub.f32 %v299, %v320
      %v346 = vsub.f32 %v300, %v327
      %v349 = vrot.slane %v346, 7
      %v350 = vsel %vm341, %v345, %v349
      %v352 = vsel %vm344, %v350, 0.0
      %v353 = vld [vmem:[%s233] sm:$0x1]
      %v355 = vperm.slane %v352, 0
      %v356 = vperm.slane %v352, 1
      %v359 = vsel %vm341, %v355, 0.0
      %v360 = vsel %vm341, %v356, 0.0
      %v361 = vadd.f32 %v359, %v360
      %362 = vadd.xlane.f32.xlu0 %v361
      %v363 = vpop.xlane.xlu0 %362
      %v364 = vrot.slane %v363, 4
      %v365 = vadd.f32 %v363, %v364
      %v366 = vrot.slane %v365, 2
      %v367 = vadd.f32 %v365, %v366
      %v368 = vrot.slane %v367, 1
      %v369 = vadd.f32 %v367, %v368
      %s370 = vtos %v369
      %v371 = vstv %s370
      %v372 = vadd.f32 %v353, %v371
      %vm373 = vcmask 0
      %374 = vst.msk [vmem:[%s233] sm:$0x1] %vm373, %v372
      %v375 = vld [vmem:[%s236] sm:$0x1]
      %v376 = vsel %vm344, 1, 0
      %v377 = vperm.slane %v376, 0
      %v378 = vperm.slane %v376, 1
      %v379 = vsel %vm341, %v377, 0
      %v380 = vsel %vm341, %v378, 0
      %v381 = vadd.s32 %v379, %v380
      %v382 = vand.u32 %v381, 65535
      %v383 = vshrl.u32 %v381, 16
      %v384 = vcvt.s32.f32 %v382
      %v385 = vcvt.s32.f32 %v383
      %386 = vadd.xlane.f32.xlu0 %v384
      %v387 = vpop.xlane.xlu0 %386
      %388 = vadd.xlane.f32.xlu0 %v385
      %v389 = vpop.xlane.xlu0 %388
      %v390 = vcvt.f32.s32 %v387
      %v391 = vcvt.f32.s32 %v389
      %v392 = vshll.u32 %v391, 16
      %v393 = vadd.s32 %v392, %v390
      %v394 = vrot.slane %v393, 4
      %v395 = vadd.s32 %v393, %v394
      %v396 = vrot.slane %v395, 2
      %v397 = vadd.s32 %v395, %v396
      %v398 = vrot.slane %v397, 1
      %v399 = vadd.s32 %v397, %v398
      %s400 = vtos %v399
      %v401 = vstv %s400
      %v402 = vadd.s32 %v375, %v401
      %403 = vst.msk [vmem:[%s236] sm:$0x1] %vm373, %v402
      %p404 = scmp.lt.s32.totalorder %s19, 1
      %s405 = scalar_select %p404, %s19, 1
      %s406 = scalar_lea.vmem %s2, %s405
      %p407 = scmp.lt.s32.totalorder %s19, 1
      %s408 = scalar_select %p407, %s19, 1
      %s409 = scalar_lea.vmem %s3, %s408
      // Predicated region
      $region33: #{cross_entropy_loss.1} parent=27 // pred_check
        %p410 = pneg %p101
      $region34: #{cross_entropy_loss.1} parent=27 // pred_check_branch
        %412 = sbr.rel (%p410) target = $region36
      $region35: #{cross_entropy_loss.1} parent=27 // pred_region
        _
      $region36: #{cross_entropy_loss.1} parent=27 // pred_fallthru
        _
      // Predicated region
      $region37: #{cross_entropy_loss.1} parent=27 // pred_check
        %p413 = pneg %p127
      $region38: #{cross_entropy_loss.1} parent=27 // pred_check_branch
        %415 = sbr.rel (%p413) target = $region40
      $region39: #{cross_entropy_loss.1} parent=27 // pred_region
        _
      $region40: #{cross_entropy_loss.1} parent=27 // pred_fallthru
        _
    $region28: #{cross_entropy_loss.1} parent=5 // pred_fallthru
      _
    %p416 = scmp.le.s32.totalorder 2, %s10
    // Predicated region
    $region41: #{cross_entropy_loss.1} parent=5 // pred_check
      %p417 = pneg %p416
    $region42: #{cross_entropy_loss.1} parent=5 // pred_check_branch
      %419 = sbr.rel (%p417) target = $region44
    $region43: #{cross_entropy_loss.1} parent=5 // pred_region
      %s420 = ssub.s32 %s10, 2
      // Predicated region
      $region45: #{cross_entropy_loss.1} parent=43 // pred_check
        %p421 = pneg %p107
      $region46: #{cross_entropy_loss.1} parent=43 // pred_check_branch
        %423 = sbr.rel (%p421) target = $region48
      $region47: #{cross_entropy_loss.1} parent=43 // pred_region
        %p424 = scmp.lt.s32.totalorder %s21, 1
        %s425 = scalar_select %p424, %s21, 1
        %s426 = scalar_lea.vmem %s2, %s425
      $region48: #{cross_entropy_loss.1} parent=43 // pred_fallthru
        _
      // Predicated region
      $region49: #{cross_entropy_loss.1} parent=43 // pred_check
        %p427 = pneg %p133
      $region50: #{cross_entropy_loss.1} parent=43 // pred_check_branch
        %429 = sbr.rel (%p427) target = $region52
      $region51: #{cross_entropy_loss.1} parent=43 // pred_region
        %p430 = scmp.lt.s32.totalorder %s21, 1
        %s431 = scalar_select %p430, %s21, 1
        %s432 = scalar_lea.vmem %s3, %s431
      $region52: #{cross_entropy_loss.1} parent=43 // pred_fallthru
        _
    $region44: #{cross_entropy_loss.1} parent=5 // pred_fallthru
      _
  $region6: #{cross_entropy_loss.1} parent=0 // loop_footer
    %s14 = sadd.s32 1, %s10
  $region7: #{cross_entropy_loss.1} parent=0 // loop_footer_branch
    %9 = sbr.rel target = $region3
  $region8: #{cross_entropy_loss.1} parent=0 // loop_exit
    _

</llo_original>
